<compile_context>
chip_gen: v6e
topology: v6e:2x2x1
jax: 0.10.0
libtpu: 0.0.40
codegen_flags: <defaults>
</compile_context>

<pallas_src>
import functools

import jax
import jax.numpy as jnp
from jax import lax
from jax.experimental import pallas as pl
from jax.experimental.pallas import tpu as pltpu


# --------------------------------------------------------------------------- #
# Helpers
# --------------------------------------------------------------------------- #
def _pooling_matrix(H, W, Ho, Wo, stride, dtype):
    """0/1 matrix M of shape (H*W, Ho*Wo): M[h*W + w, ho*Wo + wo] = 1 iff input
    pixel (h, w) lies in the stride x stride window of output pixel (ho, wo)."""
    hw = jnp.arange(H * W, dtype=jnp.int32)
    h = hw // W
    w = hw % W
    valid = (h < Ho * stride) & (w < Wo * stride)          # floor mode (PyTorch parity)
    col = (h // stride) * Wo + (w // stride)
    cols = jnp.arange(Ho * Wo, dtype=jnp.int32)
    return ((col[:, None] == cols[None, :]) & valid[:, None]).astype(dtype)


def _round_up(v, m):
    return (v + m - 1) // m * m


def _padded_tile_bytes(rows, cols, itemsize):
    """VMEM footprint of a (rows, cols) tile: (8,128) tiling + sub-32-bit packing."""
    sub = 8 * max(1, 4 // itemsize)
    return _round_up(max(rows, 1), sub) * _round_up(max(cols, 1), 128) * itemsize


def _vmem_capacity_bytes():
    try:
        return int(pltpu.get_tpu_info().vmem_capacity_bytes)
    except Exception:
        return 64 << 20                                    # conservative (v7x-sized)


def _budget_for_generation():
    cap = _vmem_capacity_bytes()
    if cap >= (100 << 20):
        # v5e / v6e: 128 MiB physical VMEM, 1 TensorCore.
        return {"target_in_block": 14 << 20, "vmem_limit": 64 << 20, "min_steps": 2}
    # v7x: 64 MiB physical VMEM, 2 TensorCores -> want >= 4 grid steps.
    return {"target_in_block": 7 << 20, "vmem_limit": 44 << 20, "min_steps": 4}


def _downsample_b_ref(x, stride):
    """Pure-JAX reference (floor-mode AvgPool2d + channel concat with zeros)."""
    N, C, H, W = x.shape
    Ho, Wo = H // stride, W // stride
    if Ho == 0 or Wo == 0:
        return jnp.zeros((N, 2 * C, Ho, Wo), x.dtype)
    xt = x[:, :, : Ho * stride, : Wo * stride]
    pooled = xt.reshape(N, C, Ho, stride, Wo, stride).mean(axis=(3, 5)).astype(x.dtype)
    return jnp.concatenate([pooled, jnp.zeros_like(pooled)], axis=1)


# --------------------------------------------------------------------------- #
# Pallas kernel
# --------------------------------------------------------------------------- #
@functools.partial(jax.jit, static_argnums=1)
def downsample_b(x: jax.Array, stride: int) -> jax.Array:
    """DownsampleB forward. x: (N, C, H, W) -> (N, 2*C, H//stride, W//stride)."""
    N, C, H, W = x.shape
    Ho, Wo = H // stride, W // stride
    if Ho == 0 or Wo == 0:                                 # degenerate: stride > H or W
        return jnp.zeros((N, 2 * C, Ho, Wo), x.dtype)

    HW, HoWo = H * W, Ho * Wo
    inv_area = 1.0 / float(stride * stride)
    itemsize = jnp.dtype(x.dtype).itemsize
    budget = _budget_for_generation()

    # Fused path merges (sample, channel) into the MXU M-dimension; it needs
    # C % 8 == 0 so the (tn*C, HoWo) -> (tn, C, HoWo) reshape is a free shape-cast
    # and the flat (tn*C, HW) input block is sublane-aligned.
    fused = (C % 8 == 0)

    m_pad = _padded_tile_bytes(HW, HoWo, itemsize)

    def in_pad(tn):
        if fused:
            return _padded_tile_bytes(tn * C, HW, itemsize)
        return tn * _padded_tile_bytes(C, HW, itemsize)

    def out_pad(tn):
        return tn * 2 * _padded_tile_bytes(C, HoWo, itemsize)

    def vmem_ok(tn):
        # Double-buffered input/output; M counted twice to stay safe even if
        # single-buffering is not applied; 2 MiB slack for compiler scratch.
        need = 2 * (in_pad(tn) + out_pad(tn)) + 2 * m_pad + (2 << 20)
        return need <= budget["vmem_limit"]

    if not vmem_ok(1):
        # TODO(synk): very large feature maps blow up the (HW, HoWo) pooling
        # matrix / f32 matmul FLOPs; a separable two-pass pooling kernel would
        # cover that regime.  Fall back to plain XLA to stay correct.
        return _downsample_b_ref(x, stride)

    # Pick samples-per-block: as large as the VMEM budget allows while keeping
    # >= min_steps grid steps (pipelining / both TensorCores on v7x).
    desired_steps = max(1, min(budget["min_steps"], N))
    tn_cap = max(1, N // desired_steps)
    tn = 1
    while tn < tn_cap and vmem_ok(tn + 1) and in_pad(tn + 1) <= budget["target_in_block"]:
        tn += 1
    grid = (pl.cdiv(N, tn),)                               # tail block masked by Pallas

    m = _pooling_matrix(H, W, Ho, Wo, stride, x.dtype)     # tiny constant, 0/1 exact

    if fused:
        x_in = x.reshape(N * C, HW)                        # free reshape (contiguous)
        in_spec = pl.BlockSpec((tn * C, HW), lambda i: (i, 0))
    else:
        x_in = x.reshape(N, C, HW)                         # free reshape (contiguous)
        in_spec = pl.BlockSpec((tn, C, HW), lambda i: (i, 0, 0))

    m_spec_kwargs = {}
    if m_pad >= (1 << 20):
        # Constant index_map => fetched once; single-buffer it when it is big so
        # double-buffering does not waste VMEM (matters most on v7x's 64 MiB).
        m_spec_kwargs = {"pipeline_mode": pl.Buffered(1)}
    m_spec = pl.BlockSpec((HW, HoWo), lambda i: (0, 0), **m_spec_kwargs)

    out_spec = pl.BlockSpec((tn, 2, C, HoWo), lambda i: (i, 0, 0, 0))

    def kernel(x_ref, m_ref, o_ref):
        mm = m_ref[...]                                    # (HW, HoWo), resident
        if fused:
            # ONE matmul: MXU M-dim = tn*C (both pooling directions at once).
            acc = jnp.dot(x_ref[...], mm, preferred_element_type=jnp.float32)
            pooled = (acc * inv_area).astype(o_ref.dtype)
            o_ref[:, 0, :, :] = pooled.reshape(tn, C, HoWo)  # free shape-cast (C%8==0)
        else:
            # C % 8 != 0: per-sample matmuls, but in a fori_loop (no static unroll).
            def body(n, carry):
                acc = jnp.dot(x_ref[n], mm, preferred_element_type=jnp.float32)
                o_ref[n, 0, :, :] = (acc * inv_area).astype(o_ref.dtype)
                return carry
            lax.fori_loop(0, tn, body, 0)
        # torch.cat zeros half: one aligned full-tile store per grid step.
        o_ref[:, 1, :, :] = jnp.zeros((tn, C, HoWo), o_ref.dtype)

    cost = pl.CostEstimate(
        flops=2 * N * C * HW * HoWo,
        transcendentals=0,
        bytes_accessed=(N * C * HW + N * 2 * C * HoWo + HW * HoWo) * itemsize,
    )

    out4 = pl.pallas_call(
        kernel,
        out_shape=jax.ShapeDtypeStruct((N, 2, C, HoWo), x.dtype),
        grid=grid,
        in_specs=[in_spec, m_spec],
        out_specs=out_spec,
        compiler_params=pltpu.CompilerParams(
            dimension_semantics=("parallel",),
            vmem_limit_bytes=budget["vmem_limit"],
        ),
        cost_estimate=cost,
    )(x_in, m)

    return out4.reshape(N, 2 * C, Ho, Wo)                  # free reshape


# --------------------------------------------------------------------------- #
# Self-test
# --------------------------------------------------------------------------- #
if __name__ == "__main__":
    key = jax.random.PRNGKey(0)

    # Primary shape implied by the module: DownsampleB(nIn=4, nOut=8, stride=2).
    N, C, H, W = 2, 4, 16, 16
    stride = 2
    x = jax.random.normal(key, (N, C, H, W), dtype=jnp.float32)
    out = jax.block_until_ready(downsample_b(x, stride))
    ref = _downsample_b_ref(x, stride)
    assert out.shape == (N, 2 * C, H // stride, W // stride), out.shape
    assert jnp.allclose(out, ref, atol=1e-5, rtol=1e-5), "mismatch (C % 8 != 0 path)"

    # Fused-MXU path (C % 8 == 0), non-divisible batch exercises the tail block,
    # plus a stride-3 case.
    for (n2, c2, h2, w2, s2) in [(5, 16, 16, 16, 2), (2, 8, 12, 12, 3)]:
        key, sub = jax.random.split(key)
        x2 = jax.random.normal(sub, (n2, c2, h2, w2), dtype=jnp.float32)
        o2 = jax.block_until_ready(downsample_b(x2, s2))
        r2 = _downsample_b_ref(x2, s2)
        assert o2.shape == r2.shape, (o2.shape, r2.shape)
        assert jnp.allclose(o2, r2, atol=1e-5, rtol=1e-5), "mismatch (fused path)"

    print("KERNEL_OK")
</pallas_src>

<mosaic_0001>
module attributes {stable_mosaic.version = 11 : i64} {
  func.func @kernel(%arg0: i32, %arg1: memref<1x4x256xf32, #tpu.memory_space<vmem>>, %arg2: memref<256x64xf32, #tpu.memory_space<vmem>>, %arg3: memref<1x2x4x64xf32, #tpu.memory_space<vmem>>) attributes {dimension_semantics = [#tpu.dimension_semantics<parallel>], iteration_bounds = array<i64: 2>, scalar_prefetch = 0 : i64, scratch_operands = 0 : i64, tpu.core_type = #tpu.core_type<tc>, window_params = [{transform_indices = @transform_0, window_bounds = array<i64: 1, 4, 256>}, {pipeline_mode = #tpu.pipeline_mode<synchronous>, transform_indices = @transform_1, window_bounds = array<i64: 256, 64>}, {transform_indices = @transform_2, window_bounds = array<i64: 1, 2, 4, 64>}]} {
    %c0 = arith.constant 0 : index
    %c0_0 = arith.constant 0 : index
    %0 = vector.load %arg2[%c0, %c0_0] : memref<256x64xf32, #tpu.memory_space<vmem>>, vector<256x64xf32>
    %c0_i32 = arith.constant 0 : i32
    %1 = arith.index_cast %c0_i32 : i32 to index
    %c0_1 = arith.constant 0 : index
    %c0_2 = arith.constant 0 : index
    %2 = vector.load %arg1[%1, %c0_1, %c0_2] : memref<1x4x256xf32, #tpu.memory_space<vmem>>, vector<1x4x256xf32>
    %3 = vector.shape_cast %2 : vector<1x4x256xf32> to vector<4x256xf32>
    %cst = arith.constant dense<0.000000e+00> : vector<4x64xf32>
    %4 = tpu.matmul %3, %0, %cst {dimension_numbers = #tpu.dot_dimension_numbers<[1], [0], [0], [1], [0, 0, 1, 1], [], []>} : vector<4x256xf32>, vector<256x64xf32>, vector<4x64xf32> -> vector<4x64xf32>
    %cst_3 = arith.constant 2.500000e-01 : f32
    %5 = vector.broadcast %cst_3 : f32 to vector<4x64xf32>
    %6 = arith.mulf %4, %5 : vector<4x64xf32>
    %7 = arith.index_cast %c0_i32 : i32 to index
    %c0_4 = arith.constant 0 : index
    %c0_5 = arith.constant 0 : index
    %c0_6 = arith.constant 0 : index
    %8 = vector.load %arg3[%7, %c0_4, %c0_5, %c0_6] : memref<1x2x4x64xf32, #tpu.memory_space<vmem>>, vector<1x1x4x64xf32>
    %9 = vector.shape_cast %8 : vector<1x1x4x64xf32> to vector<4x64xf32>
    %10 = vector.shape_cast %6 : vector<4x64xf32> to vector<1x1x4x64xf32>
    tpu.vector_store %arg3[%7, %c0_4, %c0_5, %c0_6], %10 {strides = array<i32>} : memref<1x2x4x64xf32, #tpu.memory_space<vmem>>, vector<1x1x4x64xf32>,
    %c1_i32 = arith.constant 1 : i32
    %cst_7 = arith.constant 0.000000e+00 : f32
    %11 = vector.broadcast %cst_7 : f32 to vector<1x4x64xf32>
    %c0_8 = arith.constant 0 : index
    %c1 = arith.constant 1 : index
    %c0_9 = arith.constant 0 : index
    %c0_10 = arith.constant 0 : index
    %12 = vector.load %arg3[%c0_8, %c1, %c0_9, %c0_10] : memref<1x2x4x64xf32, #tpu.memory_space<vmem>>, vector<1x1x4x64xf32>
    %13 = vector.shape_cast %12 : vector<1x1x4x64xf32> to vector<1x4x64xf32>
    %14 = vector.shape_cast %11 : vector<1x4x64xf32> to vector<1x1x4x64xf32>
    tpu.vector_store %arg3[%c0_8, %c1, %c0_9, %c0_10], %14 {strides = array<i32>} : memref<1x2x4x64xf32, #tpu.memory_space<vmem>>, vector<1x1x4x64xf32>,
    return
  }
  func.func @transform_0(%arg0: i32) -> (i32, i32, i32) {
    %c0_i32 = arith.constant 0 : i32
    %c0_i32_0 = arith.constant 0 : i32
    %c0_i32_1 = arith.constant 0 : i32
    return %arg0, %c0_i32, %c0_i32_0 : i32, i32, i32
  }
  func.func @transform_1(%arg0: i32) -> (i32, i32) {
    %c0_i32 = arith.constant 0 : i32
    %c0_i32_0 = arith.constant 0 : i32
    %c0_i32_1 = arith.constant 0 : i32
    return %c0_i32, %c0_i32_0 : i32, i32
  }
  func.func @transform_2(%arg0: i32) -> (i32, i32, i32, i32) {
    %c0_i32 = arith.constant 0 : i32
    %c0_i32_0 = arith.constant 0 : i32
    %c0_i32_1 = arith.constant 0 : i32
    %c0_i32_2 = arith.constant 0 : i32
    return %arg0, %c0_i32, %c0_i32_0, %c0_i32_1 : i32, i32, i32, i32
  }
}

</mosaic_0001>

<llo_original>
// kernel: downsample_b.1
$region0: #{downsample_b.1}
  #allocation0 [shape = 'u32[]', space=smem, size = 0x4, offset = 0x4, fixed_abs, tag = 'smem constant byte address 0x4 - core index']
  #allocation1 [shape = 'u32[144,128]{1,0:T(1,128)}', space=vmem, size = 0x12000, scoped, tag = 'internal scratch']
  %s0 = inlined_call_operand.vmem [shape: f32[2,4,256], index: 0, kind: input, shape index: {}]
  %s1 = inlined_call_operand.vmem [shape: f32[256,64], index: 1, kind: input, shape index: {}]
  %s2 = inlined_call_operand.vmem [shape: f32[2,2,4,64], index: 2, kind: output, shape index: {}]
  %s3 = sld [smem:[#allocation0]]
  $region41: #{downsample_b.1} parent=0
    _
  %s5 = ssub.s32 1, %s3
  %s6 = scalar_select 0, %s5, %s3
  loop: start=0, step=1, limit=4
  $region2: #{downsample_b.1} parent=0 // loop_pre_header
    _
  $region3: #{downsample_b.1} parent=0 // loop_header
    %s8 = sphi 0, %s12
    %p9 = scmp.ge.s32.totalorder %s8, 4
    %s18 = sphi 0, %s20
    %s21 = sphi 0, %s18
    %s22 = sphi 0, %s21
    %s38 = sphi 0, %s22
    %s42 = sphi 0, %s42
    %s44 = sphi 0, %s42
    %s45 = sphi 0, %s44
    %s59 = sphi 0, %s45
    %s65 = sphi 0, %s67
    %s68 = sphi 0, %s65
    %s69 = sphi 0, %s68
    %s85 = sphi 0, %s69
  $region4: #{downsample_b.1} parent=0 // loop_header_branch
    %11 = sbr.rel (%p9) target = $region8
  $region5: #{downsample_b.1} parent=0 // loop_body
    %s13 = ssub.s32 %s8, 1
    %s14 = ssub.s32 %s8, 2
    %s15 = sadd.s32 %s8, 1
    %s16 = ssub.s32 %s8, %s15
    %p17 = scmp.eq.s32.totalorder %s16, 0
    %s19 = sadd.s32 %s18, 1
    %s20 = scalar_select %p17, %s18, %s19
    %p23 = pneg %p17
    %p24 = scmp.eq.s32.totalorder %s8, 1
    %p25 = por %p23, %p24
    %p26 = scmp.ne.s32.totalorder %s18, %s21
    %p27 = scmp.eq.s32.totalorder %s8, 0
    %p28 = por %p26, %p27
    %p29 = scmp.ne.s32.totalorder %s18, %s21
    %p30 = scmp.eq.s32.totalorder %s13, 1
    %p31 = por %p29, %p30
    %p32 = scmp.ne.s32.totalorder %s21, %s22
    %p33 = scmp.eq.s32.totalorder %s13, 0
    %p34 = por %p32, %p33
    %p35 = scmp.ne.s32.totalorder %s21, %s22
    %p36 = scmp.eq.s32.totalorder %s14, 1
    %p37 = por %p35, %p36
    %p39 = scmp.ne.s32.totalorder %s22, %s38
    %p40 = scmp.eq.s32.totalorder %s14, 0
    %p41 = por %p39, %p40
    %s43 = sadd.s32 %s42, 1
    %p46 = scmp.eq.s32.totalorder %s8, 1
    %p47 = scmp.ne.s32.totalorder %s42, %s44
    %p48 = scmp.eq.s32.totalorder %s8, 0
    %p49 = por %p47, %p48
    %p50 = scmp.ne.s32.totalorder %s42, %s44
    %p51 = scmp.eq.s32.totalorder %s13, 1
    %p52 = por %p50, %p51
    %p53 = scmp.ne.s32.totalorder %s44, %s45
    %p54 = scmp.eq.s32.totalorder %s13, 0
    %p55 = por %p53, %p54
    %p56 = scmp.ne.s32.totalorder %s44, %s45
    %p57 = scmp.eq.s32.totalorder %s14, 1
    %p58 = por %p56, %p57
    %p60 = scmp.ne.s32.totalorder %s45, %s59
    %p61 = scmp.eq.s32.totalorder %s14, 0
    %p62 = por %p60, %p61
    %s63 = ssub.s32 %s8, %s15
    %p64 = scmp.eq.s32.totalorder %s63, 0
    %s66 = sadd.s32 %s65, 1
    %s67 = scalar_select %p64, %s65, %s66
    %p70 = pneg %p64
    %p71 = scmp.eq.s32.totalorder %s8, 1
    %p72 = por %p70, %p71
    %p73 = scmp.ne.s32.totalorder %s65, %s68
    %p74 = scmp.eq.s32.totalorder %s8, 0
    %p75 = por %p73, %p74
    %p76 = scmp.ne.s32.totalorder %s65, %s68
    %p77 = scmp.eq.s32.totalorder %s13, 1
    %p78 = por %p76, %p77
    %p79 = scmp.ne.s32.totalorder %s68, %s69
    %p80 = scmp.eq.s32.totalorder %s13, 0
    %p81 = por %p79, %p80
    %p82 = scmp.ne.s32.totalorder %s68, %s69
    %p83 = scmp.eq.s32.totalorder %s14, 1
    %p84 = por %p82, %p83
    %p86 = scmp.ne.s32.totalorder %s69, %s85
    %p87 = scmp.eq.s32.totalorder %s14, 0
    %p88 = por %p86, %p87
    %p89 = scmp.le.s32.totalorder 1, %s8
    %p90 = scmp.lt.s32.totalorder %s8, 3
    %p91 = pnand %p89, %p90
    %p92 = pneg %p91
    // Predicated region
    $region9: #{downsample_b.1} parent=5 // pred_check
      _
    $region10: #{downsample_b.1} parent=5 // pred_check_branch
      %94 = sbr.rel (%p91) target = $region12
    $region11: #{downsample_b.1} parent=5 // pred_region
      %s95 = ssub.s32 %s8, 1
      // Predicated region
      $region13: #{downsample_b.1} parent=11 // pred_check
        %p96 = pneg %p55
      $region14: #{downsample_b.1} parent=11 // pred_check_branch
        %98 = sbr.rel (%p96) target = $region16
      $region15: #{downsample_b.1} parent=11 // pred_region
        _
      $region16: #{downsample_b.1} parent=11 // pred_fallthru
        _
    $region12: #{downsample_b.1} parent=5 // pred_fallthru
      _
    %p99 = scmp.lt.s32.totalorder %s8, 2
    // Predicated region
    $region17: #{downsample_b.1} parent=5 // pred_check
      %p100 = pneg %p99
    $region18: #{downsample_b.1} parent=5 // pred_check_branch
      %102 = sbr.rel (%p100) target = $region20
    $region19: #{downsample_b.1} parent=5 // pred_region
      // Predicated region
      $region21: #{downsample_b.1} parent=19 // pred_check
        %p103 = pneg %p28
      $region22: #{downsample_b.1} parent=19 // pred_check_branch
        %105 = sbr.rel (%p103) target = $region24
      $region23: #{downsample_b.1} parent=19 // pred_region
        %p106 = scmp.lt.s32.totalorder %s8, 1
        %s107 = scalar_select %p106, %s8, 1
        %s108 = smul.addr %s107, 2
        %s109 = smul.addr %s108, 4
        %s110 = scalar_lea.vmem %s0, %s109
      $region24: #{downsample_b.1} parent=19 // pred_fallthru
        _
    $region20: #{downsample_b.1} parent=5 // pred_fallthru
      _
    %p111 = scmp.le.s32.totalorder 1, %s8
    %p112 = scmp.lt.s32.totalorder %s8, 3
    %p113 = pnand %p111, %p112
    %p114 = pneg %p113
    // Predicated region
    $region25: #{downsample_b.1} parent=5 // pred_check
      _
    $region26: #{downsample_b.1} parent=5 // pred_check_branch
      %116 = sbr.rel (%p113) target = $region28
    $region27: #{downsample_b.1} parent=5 // pred_region
      %s117 = ssub.s32 %s8, 1
      %p118 = scmp.lt.s32.totalorder %s13, 1
      %s119 = scalar_select %p118, %s13, 1
      %s120 = smul.addr %s119, 2
      %s121 = smul.addr %s120, 4
      %s122 = scalar_lea.vmem %s0, %s121
      %p123 = pneg %p34
      %p124 = pneg %p31
      %p125 = pneg %p55
      %p126 = pneg %p52
      %p127 = pneg %p81
      %p128 = pneg %p78
      %p129 = scmp.lt.s32.totalorder %s13, 1
      %s130 = scalar_select %p129, %s13, 1
      %s131 = smul.addr %s130, 2
      %s132 = smul.addr %s131, 4
      %s133 = scalar_lea.vmem %s2, %s132
      %p134 = scmp.lt.s32.totalorder %s13, 1
      %s135 = scalar_select %p134, %s13, 1
      %s136 = smul.addr %s135, 2
      %s137 = smul.addr %s136, 4
      %s138 = scalar_lea.vmem %s0, %s137
      %p139 = scmp.lt.s32.totalorder %s13, 1
      %s140 = scalar_select %p139, %s13, 1
      %s141 = smul.addr %s140, 2
      %s142 = smul.addr %s141, 4
      %s143 = scalar_lea.vmem %s2, %s142
      %v144 = vld [vmem:[%s1] sm:$0xff]
      %v145 = vld [vmem:[%s1 + $0x8] sm:$0xff]
      %v146 = vld [vmem:[%s1 + $0x10] sm:$0xff]
      %v147 = vld [vmem:[%s1 + $0x18] sm:$0xff]
      %v148 = vld [vmem:[%s1 + $0x20] sm:$0xff]
      %v149 = vld [vmem:[%s1 + $0x28] sm:$0xff]
      %v150 = vld [vmem:[%s1 + $0x30] sm:$0xff]
      %v151 = vld [vmem:[%s1 + $0x38] sm:$0xff]
      %v152 = vld [vmem:[%s1 + $0x40] sm:$0xff]
      %v153 = vld [vmem:[%s1 + $0x48] sm:$0xff]
      %v154 = vld [vmem:[%s1 + $0x50] sm:$0xff]
      %v155 = vld [vmem:[%s1 + $0x58] sm:$0xff]
      %v156 = vld [vmem:[%s1 + $0x60] sm:$0xff]
      %v157 = vld [vmem:[%s1 + $0x68] sm:$0xff]
      %v158 = vld [vmem:[%s1 + $0x70] sm:$0xff]
      %v159 = vld [vmem:[%s1 + $0x78] sm:$0xff]
      %v160 = vld [vmem:[%s1 + $0x80] sm:$0xff]
      %v161 = vld [vmem:[%s1 + $0x88] sm:$0xff]
      %v162 = vld [vmem:[%s1 + $0x90] sm:$0xff]
      %v163 = vld [vmem:[%s1 + $0x98] sm:$0xff]
      %v164 = vld [vmem:[%s1 + $0xa0] sm:$0xff]
      %v165 = vld [vmem:[%s1 + $0xa8] sm:$0xff]
      %v166 = vld [vmem:[%s1 + $0xb0] sm:$0xff]
      %v167 = vld [vmem:[%s1 + $0xb8] sm:$0xff]
      %v168 = vld [vmem:[%s1 + $0xc0] sm:$0xff]
      %v169 = vld [vmem:[%s1 + $0xc8] sm:$0xff]
      %v170 = vld [vmem:[%s1 + $0xd0] sm:$0xff]
      %v171 = vld [vmem:[%s1 + $0xd8] sm:$0xff]
      %v172 = vld [vmem:[%s1 + $0xe0] sm:$0xff]
      %v173 = vld [vmem:[%s1 + $0xe8] sm:$0xff]
      %v174 = vld [vmem:[%s1 + $0xf0] sm:$0xff]
      %v175 = vld [vmem:[%s1 + $0xf8] sm:$0xff]
      %v176 = vld [vmem:[%s138] sm:$0xff]
      %v178 = vcombine.high %v176, %v176
      %180 = vmatprep.subr.mxu0 0.0
      %181 = vmatpush1.msra.mxu0 %v159
      %182 = vmatprep.subr.mxu0 0.0
      %183 = vmatpush1.msra.mxu0 %v158
      %184 = vmatprep.subr.mxu0 0.0
      %185 = vmatpush1.msra.mxu0 %v157
      %186 = vmatprep.subr.mxu0 0.0
      %187 = vmatpush1.msra.mxu0 %v156
      %188 = vmatprep.subr.mxu0 0.0
      %189 = vmatpush1.msra.mxu0 %v155
      %190 = vmatprep.subr.mxu0 0.0
      %191 = vmatpush1.msra.mxu0 %v154
      %192 = vmatprep.subr.mxu0 0.0
      %193 = vmatpush1.msra.mxu0 %v153
      %194 = vmatprep.subr.mxu0 0.0
      %195 = vmatpush1.msra.mxu0 %v152
      %196 = vmatprep.subr.mxu0 0.0
      %197 = vmatpush1.msra.mxu0 %v151
      %198 = vmatprep.subr.mxu0 0.0
      %199 = vmatpush1.msra.mxu0 %v150
      %200 = vmatprep.subr.mxu0 0.0
      %201 = vmatpush1.msra.mxu0 %v149
      %202 = vmatprep.subr.mxu0 0.0
      %203 = vmatpush1.msra.mxu0 %v148
      %204 = vmatprep.subr.mxu0 0.0
      %205 = vmatpush1.msra.mxu0 %v147
      %206 = vmatprep.subr.mxu0 0.0
      %207 = vmatpush1.msra.mxu0 %v146
      %208 = vmatprep.subr.mxu0 0.0
      %209 = vmatpush1.msra.mxu0 %v145
      %210 = vmatprep.subr.mxu0 0.0
      %211 = vmatpush1.msra.mxu0 %v144
      %212 = vmatprep.subr.mxu0 0.0
      %213 = vmatpush2.msra.mxu0 %v175
      %214 = vmatprep.subr.mxu0 0.0
      %215 = vmatpush2.msra.mxu0 %v174
      %216 = vmatprep.subr.mxu0 0.0
      %217 = vmatpush2.msra.mxu0 %v173
      %218 = vmatprep.subr.mxu0 0.0
      %219 = vmatpush2.msra.mxu0 %v172
      %220 = vmatprep.subr.mxu0 0.0
      %221 = vmatpush2.msra.mxu0 %v171
      %222 = vmatprep.subr.mxu0 0.0
      %223 = vmatpush2.msra.mxu0 %v170
      %224 = vmatprep.subr.mxu0 0.0
      %225 = vmatpush2.msra.mxu0 %v169
      %226 = vmatprep.subr.mxu0 0.0
      %227 = vmatpush2.msra.mxu0 %v168
      %228 = vmatprep.subr.mxu0 0.0
      %229 = vmatpush2.msra.mxu0 %v167
      %230 = vmatprep.subr.mxu0 0.0
      %231 = vmatpush2.msra.mxu0 %v166
      %232 = vmatprep.subr.mxu0 0.0
      %233 = vmatpush2.msra.mxu0 %v165
      %234 = vmatprep.subr.mxu0 0.0
      %235 = vmatpush2.msra.mxu0 %v164
      %236 = vmatprep.subr.mxu0 0.0
      %237 = vmatpush2.msra.mxu0 %v163
      %238 = vmatprep.subr.mxu0 0.0
      %239 = vmatpush2.msra.mxu0 %v162
      %240 = vmatprep.subr.mxu0 0.0
      %241 = vmatpush2.msra.mxu0 %v161
      %242 = vmatprep.subr.mxu0 0.0
      %243 = vmatpush2.msra.mxu0 %v160
      %244 = vmatprep.mubr.f32.mxu0 %v178
      %245 = vmatmul.mubr.f32.gmra.mxu0 %v176
      %v246 = vpop.f32.mrf.mxu0
      %v247 = vadd.f32 0.0, %v246
      %v248 = vpop.f32.mrf.mxu0
      %249 = vdwg.mxu0
      %v250 = vmul.f32 %v247, 0.25
      %vm251 = vcmask 519168
      %252 = vst.msk [vmem:[%s143] sm:$0xf] %vm251, %v250
      %s253 = scalar_lea.vmem %s143, 4
      %254 = vst.msk [vmem:[%s253] sm:$0xf] %vm251, 0.0
      %p255 = scmp.lt.s32.totalorder %s13, 1
      %s256 = scalar_select %p255, %s13, 1
      %s257 = smul.addr %s256, 2
      %s258 = smul.addr %s257, 4
      %s259 = scalar_lea.vmem %s2, %s258
      // Predicated region
      $region29: #{downsample_b.1} parent=27 // pred_check
        %p260 = pneg %p78
      $region30: #{downsample_b.1} parent=27 // pred_check_branch
        %262 = sbr.rel (%p260) target = $region32
      $region31: #{downsample_b.1} parent=27 // pred_region
        _
      $region32: #{downsample_b.1} parent=27 // pred_fallthru
        _
    $region28: #{downsample_b.1} parent=5 // pred_fallthru
      _
    %p263 = scmp.le.s32.totalorder 2, %s8
    // Predicated region
    $region33: #{downsample_b.1} parent=5 // pred_check
      %p264 = pneg %p263
    $region34: #{downsample_b.1} parent=5 // pred_check_branch
      %266 = sbr.rel (%p264) target = $region36
    $region35: #{downsample_b.1} parent=5 // pred_region
      %s267 = ssub.s32 %s8, 2
      // Predicated region
      $region37: #{downsample_b.1} parent=35 // pred_check
        %p268 = pneg %p84
      $region38: #{downsample_b.1} parent=35 // pred_check_branch
        %270 = sbr.rel (%p268) target = $region40
      $region39: #{downsample_b.1} parent=35 // pred_region
        %p271 = scmp.lt.s32.totalorder %s14, 1
        %s272 = scalar_select %p271, %s14, 1
        %s273 = smul.addr %s272, 2
        %s274 = smul.addr %s273, 4
        %s275 = scalar_lea.vmem %s2, %s274
      $region40: #{downsample_b.1} parent=35 // pred_fallthru
        _
    $region36: #{downsample_b.1} parent=5 // pred_fallthru
      _
  $region6: #{downsample_b.1} parent=0 // loop_footer
    %s12 = sadd.s32 1, %s8
  $region7: #{downsample_b.1} parent=0 // loop_footer_branch
    %7 = sbr.rel target = $region3
  $region8: #{downsample_b.1} parent=0 // loop_exit
    _

</llo_original>
